<compile_context>
chip_gen: v7x
topology: tpu7x:2x2x1
jax: 0.10.0
libtpu: 0.0.40
codegen_flags: <defaults>
</compile_context>

<pallas_src>
import functools

import jax
import jax.numpy as jnp
from jax.experimental import pallas as pl
from jax.experimental.pallas import tpu as pltpu

LANES = 128


def _pad8(n):
    return -(-n // 8) * 8


def _qnetwork_kernel(
    x_ref, slab_ref, out_ref, *,
    S, A, fc1, fc2, r_w1, r_w12, r_w2, r_wh, r_b,
):
    x = x_ref[...]                                            # (B, S)

    # Static, 8-row-aligned carves out of the single packed weight slab.
    w1 = slab_ref[r_w1:r_w1 + S, 0:fc1]                       # (S, fc1)
    w12 = slab_ref[r_w12:r_w12 + fc1, 0:fc2]                  # (fc1, fc2)
    w2c = slab_ref[r_w2:r_w2 + fc2, 0:2 * fc2]                # (fc2, 2*fc2)  = [W2 | W2bis]
    wh = slab_ref[r_wh:r_wh + 2 * fc2, :]                     # (2*fc2, 128)  block-diag head
    bias = slab_ref[r_b:r_b + 8, :]                           # (8, 128) bias rows

    b1 = bias[0:1, 0:fc1]
    b12 = bias[1:2, 0:fc2]
    b2c = bias[2:3, 0:2 * fc2]
    bh = bias[3:4, :]

    # Shared trunk.
    h = jnp.maximum(jnp.dot(x, w1, preferred_element_type=jnp.float32) + b1, 0.0)
    h = jnp.maximum(jnp.dot(h, w12, preferred_element_type=jnp.float32) + b12, 0.0)

    # Fused value/advantage hidden layers: one matmul produces both branches.
    hb = jnp.maximum(jnp.dot(h, w2c, preferred_element_type=jnp.float32) + b2c, 0.0)

    # Fused head: lanes [0, A) = advantage, lane A = value, rest = 0.
    head = jnp.maximum(jnp.dot(hb, wh, preferred_element_type=jnp.float32) + bh, 0.0)

    adv = head[:, 0:A]                                        # (B, A)
    value = head[:, A:A + 1]                                  # (B, 1)
    # PyTorch `.mean()` with no dim = mean over ALL elements (batch + actions).
    adv_mean = jnp.mean(adv)

    # Lane-dense (B, 128) store; lanes >= A are garbage and sliced off outside.
    out_ref[...] = (value + (head - adv_mean)).astype(out_ref.dtype)


def pack_qnetwork_params(params, state_size, action_size, fc1_units=32, fc2_units=16):
    """Pack all weights/biases into one (rows, 128) f32 slab (built once per
    parameter update; reused across forward calls).  Returns (slab, offsets)."""
    assert fc1_units <= LANES and 2 * fc2_units <= LANES and action_size + 1 <= LANES

    r_w1 = 0
    r_w12 = r_w1 + _pad8(state_size)
    r_w2 = r_w12 + _pad8(fc1_units)
    r_wh = r_w2 + _pad8(fc2_units)
    r_b = r_wh + _pad8(2 * fc2_units)
    n_rows = r_b + 8

    slab = jnp.zeros((n_rows, LANES), jnp.float32)
    # Trunk.
    slab = slab.at[r_w1:r_w1 + state_size, 0:fc1_units].set(params["w1"])
    slab = slab.at[r_w12:r_w12 + fc1_units, 0:fc2_units].set(params["w12"])
    # Fused branch hidden weights: [W2 | W2bis].
    slab = slab.at[r_w2:r_w2 + fc2_units, 0:fc2_units].set(params["w2"])
    slab = slab.at[r_w2:r_w2 + fc2_units, fc2_units:2 * fc2_units].set(params["w2b"])
    # Block-diagonal head: advantage -> lanes [0, A), value -> lane A.
    slab = slab.at[r_wh + fc2_units:r_wh + 2 * fc2_units, 0:action_size].set(params["w3b"])
    slab = slab.at[r_wh:r_wh + fc2_units, action_size:action_size + 1].set(params["w3"])
    # Biases (one row each; fused branch/head biases share rows).
    slab = slab.at[r_b + 0, 0:fc1_units].set(params["b1"])
    slab = slab.at[r_b + 1, 0:fc2_units].set(params["b12"])
    slab = slab.at[r_b + 2, 0:fc2_units].set(params["b2"])
    slab = slab.at[r_b + 2, fc2_units:2 * fc2_units].set(params["b2b"])
    slab = slab.at[r_b + 3, 0:action_size].set(params["b3b"])
    slab = slab.at[r_b + 3, action_size].set(params["b3"][0])

    offsets = dict(r_w1=r_w1, r_w12=r_w12, r_w2=r_w2, r_wh=r_wh, r_b=r_b)
    return slab, offsets


def qnetwork_forward(state, slab, *, state_size, action_size,
                     fc1_units, fc2_units, r_w1, r_w12, r_w2, r_wh, r_b):
    """state: (B, state_size) f32.  slab: packed parameter slab."""
    B = state.shape[0]

    kernel = functools.partial(
        _qnetwork_kernel,
        S=state_size, A=action_size, fc1=fc1_units, fc2=fc2_units,
        r_w1=r_w1, r_w12=r_w12, r_w2=r_w2, r_wh=r_wh, r_b=r_b,
    )

    flops = 2 * B * (state_size * fc1_units + fc1_units * fc2_units
                     + fc2_units * 2 * fc2_units + 2 * fc2_units * LANES)
    bytes_accessed = 4 * (state.size + slab.size + B * LANES)

    vmem_spec = pl.BlockSpec(memory_space=pltpu.MemorySpace.VMEM)
    out_padded = pl.pallas_call(
        kernel,
        out_shape=jax.ShapeDtypeStruct((B, LANES), jnp.float32),
        in_specs=[vmem_spec, vmem_spec],
        out_specs=vmem_spec,
        cost_estimate=pl.CostEstimate(
            flops=flops, transcendentals=0, bytes_accessed=bytes_accessed),
    )(state, slab)

    return out_padded[:, :action_size]


def init_params(key, state_size, action_size, fc1_units=32, fc2_units=16):
    """PyTorch-style init: U(-1/sqrt(fan_in), 1/sqrt(fan_in)).  Weights stored
    as (in_features, out_features); biases as (out_features,)."""
    layer_dims = {
        "1": (state_size, fc1_units),
        "12": (fc1_units, fc2_units),
        "2": (fc2_units, fc2_units),
        "3": (fc2_units, 1),
        "2b": (fc2_units, fc2_units),
        "3b": (fc2_units, action_size),
    }
    params = {}
    for name, (fan_in, fan_out) in layer_dims.items():
        key, kw, kb = jax.random.split(key, 3)
        bound = 1.0 / jnp.sqrt(jnp.float32(fan_in))
        params[f"w{name}"] = jax.random.uniform(
            kw, (fan_in, fan_out), jnp.float32, -bound, bound)
        params[f"b{name}"] = jax.random.uniform(
            kb, (fan_out,), jnp.float32, -bound, bound)
    return params


def qnetwork_ref(state, params):
    """Pure-JAX reference (unfused, unpacked) for correctness checking."""
    def lin_relu(h, w, b):
        return jnp.maximum(h @ w + b, 0.0)

    h = lin_relu(state, params["w1"], params["b1"])
    h = lin_relu(h, params["w12"], params["b12"])
    xv = lin_relu(h, params["w2"], params["b2"])
    xv = lin_relu(xv, params["w3"], params["b3"])
    xa = lin_relu(h, params["w2b"], params["b2b"])
    xa = lin_relu(xa, params["w3b"], params["b3b"])
    return xv + (xa - jnp.mean(xa))


if __name__ == "__main__":
    # Small shapes consistent with the module: batch=8, state_size=8, actions=4.
    B, STATE_SIZE, ACTION_SIZE = 8, 8, 4
    FC1, FC2 = 32, 16

    key = jax.random.PRNGKey(0)
    key, kx = jax.random.split(key)
    state = jax.random.normal(kx, (B, STATE_SIZE), dtype=jnp.float32)

    params = init_params(key, STATE_SIZE, ACTION_SIZE, FC1, FC2)
    slab, offsets = pack_qnetwork_params(params, STATE_SIZE, ACTION_SIZE, FC1, FC2)

    fwd = jax.jit(functools.partial(
        qnetwork_forward,
        state_size=STATE_SIZE, action_size=ACTION_SIZE,
        fc1_units=FC1, fc2_units=FC2, **offsets))

    qvals = jax.block_until_ready(fwd(state, slab))

    expected = qnetwork_ref(state, params)
    assert qvals.shape == (B, ACTION_SIZE)
    assert jnp.allclose(qvals, expected, atol=1e-5, rtol=1e-5), (
        "Pallas output does not match JAX reference"
    )

    print("KERNEL_OK")
</pallas_src>

<mosaic_0001>
module attributes {stable_mosaic.version = 11 : i64} {
  func.func @_qnetwork_kernel(%arg0: memref<8x8xf32, #tpu.memory_space<vmem>>, %arg1: memref<96x128xf32, #tpu.memory_space<vmem>>, %arg2: memref<8x128xf32, #tpu.memory_space<vmem>>) attributes {dimension_semantics = [], scalar_prefetch = 0 : i64, scratch_operands = 0 : i64, tpu.core_type = #tpu.core_type<tc>} {
    %c0 = arith.constant 0 : index
    %c0_0 = arith.constant 0 : index
    %0 = vector.load %arg0[%c0, %c0_0] : memref<8x8xf32, #tpu.memory_space<vmem>>, vector<8x8xf32>
    %c0_1 = arith.constant 0 : index
    %c0_2 = arith.constant 0 : index
    %1 = vector.load %arg1[%c0_1, %c0_2] : memref<96x128xf32, #tpu.memory_space<vmem>>, vector<8x32xf32>
    %c8 = arith.constant 8 : index
    %c0_3 = arith.constant 0 : index
    %2 = vector.load %arg1[%c8, %c0_3] : memref<96x128xf32, #tpu.memory_space<vmem>>, vector<32x16xf32>
    %c40 = arith.constant 40 : index
    %c0_4 = arith.constant 0 : index
    %3 = vector.load %arg1[%c40, %c0_4] : memref<96x128xf32, #tpu.memory_space<vmem>>, vector<16x32xf32>
    %c56 = arith.constant 56 : index
    %c0_5 = arith.constant 0 : index
    %4 = vector.load %arg1[%c56, %c0_5] : memref<96x128xf32, #tpu.memory_space<vmem>>, vector<32x128xf32>
    %c88 = arith.constant 88 : index
    %c0_6 = arith.constant 0 : index
    %5 = vector.load %arg1[%c88, %c0_6] : memref<96x128xf32, #tpu.memory_space<vmem>>, vector<8x128xf32>
    %6 = vector.extract_strided_slice %5 {offsets = [0, 0], sizes = [1, 32], strides = [1, 1]} : vector<8x128xf32> to vector<1x32xf32>
    %7 = vector.extract_strided_slice %5 {offsets = [1, 0], sizes = [1, 16], strides = [1, 1]} : vector<8x128xf32> to vector<1x16xf32>
    %8 = vector.extract_strided_slice %5 {offsets = [2, 0], sizes = [1, 32], strides = [1, 1]} : vector<8x128xf32> to vector<1x32xf32>
    %9 = vector.extract_strided_slice %5 {offsets = [3, 0], sizes = [1, 128], strides = [1, 1]} : vector<8x128xf32> to vector<1x128xf32>
    %cst = arith.constant dense<0.000000e+00> : vector<8x32xf32>
    %10 = tpu.matmul %0, %1, %cst {dimension_numbers = #tpu.dot_dimension_numbers<[1], [0], [0], [1], [0, 0, 1, 1], [], []>} : vector<8x8xf32>, vector<8x32xf32>, vector<8x32xf32> -> vector<8x32xf32>
    %11 = vector.broadcast %6 : vector<1x32xf32> to vector<8x32xf32>
    %12 = arith.addf %10, %11 : vector<8x32xf32>
    %cst_7 = arith.constant 0.000000e+00 : f32
    %13 = vector.broadcast %cst_7 : f32 to vector<8x32xf32>
    %14 = arith.maximumf %12, %13 : vector<8x32xf32>
    %cst_8 = arith.constant dense<0.000000e+00> : vector<8x16xf32>
    %15 = tpu.matmul %14, %2, %cst_8 {dimension_numbers = #tpu.dot_dimension_numbers<[1], [0], [0], [1], [0, 0, 1, 1], [], []>} : vector<8x32xf32>, vector<32x16xf32>, vector<8x16xf32> -> vector<8x16xf32>
    %16 = vector.broadcast %7 : vector<1x16xf32> to vector<8x16xf32>
    %17 = arith.addf %15, %16 : vector<8x16xf32>
    %cst_9 = arith.constant 0.000000e+00 : f32
    %18 = vector.broadcast %cst_9 : f32 to vector<8x16xf32>
    %19 = arith.maximumf %17, %18 : vector<8x16xf32>
    %cst_10 = arith.constant dense<0.000000e+00> : vector<8x32xf32>
    %20 = tpu.matmul %19, %3, %cst_10 {dimension_numbers = #tpu.dot_dimension_numbers<[1], [0], [0], [1], [0, 0, 1, 1], [], []>} : vector<8x16xf32>, vector<16x32xf32>, vector<8x32xf32> -> vector<8x32xf32>
    %21 = vector.broadcast %8 : vector<1x32xf32> to vector<8x32xf32>
    %22 = arith.addf %20, %21 : vector<8x32xf32>
    %cst_11 = arith.constant 0.000000e+00 : f32
    %23 = vector.broadcast %cst_11 : f32 to vector<8x32xf32>
    %24 = arith.maximumf %22, %23 : vector<8x32xf32>
    %cst_12 = arith.constant dense<0.000000e+00> : vector<8x128xf32>
    %25 = tpu.matmul %24, %4, %cst_12 {dimension_numbers = #tpu.dot_dimension_numbers<[1], [0], [0], [1], [0, 0, 1, 1], [], []>} : vector<8x32xf32>, vector<32x128xf32>, vector<8x128xf32> -> vector<8x128xf32>
    %26 = vector.broadcast %9 : vector<1x128xf32> to vector<8x128xf32>
    %27 = arith.addf %25, %26 : vector<8x128xf32>
    %cst_13 = arith.constant 0.000000e+00 : f32
    %28 = vector.broadcast %cst_13 : f32 to vector<8x128xf32>
    %29 = arith.maximumf %27, %28 : vector<8x128xf32>
    %30 = vector.extract_strided_slice %29 {offsets = [0, 0], sizes = [8, 4], strides = [1, 1]} : vector<8x128xf32> to vector<8x4xf32>
    %31 = vector.extract_strided_slice %29 {offsets = [0, 4], sizes = [8, 1], strides = [1, 1]} : vector<8x128xf32> to vector<8x1xf32>
    %32 = vector.shape_cast %30 : vector<8x4xf32> to vector<1x8x4xf32>
    %cst_14 = arith.constant dense<0.000000e+00> : vector<1xf32>
    %33 = vector.multi_reduction <add>, %32, %cst_14 [1, 2] : vector<1x8x4xf32> to vector<1xf32>
    %34 = vector.shape_cast %33 : vector<1xf32> to vector<1x1x1xf32>
    %35 = vector.extract %34[0, 0, 0] : f32 from vector<1x1x1xf32>
    %cst_15 = arith.constant 3.200000e+01 : f32
    %36 = arith.divf %35, %cst_15 : f32
    %37 = vector.broadcast %36 : f32 to vector<8x128xf32>
    %38 = arith.subf %29, %37 : vector<8x128xf32>
    %39 = vector.broadcast %31 : vector<8x1xf32> to vector<8x128xf32>
    %40 = arith.addf %39, %38 : vector<8x128xf32>
    %c0_16 = arith.constant 0 : index
    %c0_17 = arith.constant 0 : index
    %41 = vector.load %arg2[%c0_16, %c0_17] : memref<8x128xf32, #tpu.memory_space<vmem>>, vector<8x128xf32>
    tpu.vector_store %arg2[%c0_16, %c0_17], %40 {strides = array<i32>} : memref<8x128xf32, #tpu.memory_space<vmem>>, vector<8x128xf32>,
    return
  }
}

</mosaic_0001>

<llo_original>
// kernel: qnetwork_forward.1
$region0: #{qnetwork_forward.1}
  #allocation0 [shape = 'u32[]', space=smem, size = 0x4, offset = 0x4, fixed_abs, tag = 'smem constant byte address 0x4 - core index']
  #allocation1 [shape = 'u32[144,128]{1,0:T(1,128)}', space=vmem, size = 0x12000, scoped, tag = 'internal scratch']
  %s0 = inlined_call_operand.hbm [shape: f32[8,8], index: 0, kind: input, shape index: {}]
  %s1 = inlined_call_operand.hbm [shape: f32[96,128], index: 1, kind: input, shape index: {}]
  %s2 = inlined_call_operand.vmem [shape: f32[8,128], index: 2, kind: output, shape index: {}]
  %s3 = sld [smem:[#allocation0]]
  $region26: #{qnetwork_forward.1} parent=0
    _
  %s5 = ssub.s32 1, %s3
  %s6 = scalar_select 0, %s5, %s3
  $region1: #{qnetwork_forward.1} parent=0
    #allocation2 [shape = 'u8[4096]{0}', space=vmem, size = 0x1000, scoped, tag = 'input window, operand 0, single buffered']
    #allocation3 [shape = 's32[1]{0}', space=sflag, size = 0x4, scoped, tag = 'scoped memory for qnetwork_forward.1']
    #allocation4 [shape = 'u8[49152]{0}', space=vmem, size = 0xc000, scoped, tag = 'input window, operand 1, single buffered']
    #allocation5 [shape = 's32[1]{0}', space=sflag, size = 0x4, scoped, tag = 'scoped memory for qnetwork_forward.1']
    %7 = vsyncpa [#allocation3], 0
    %8 = vsyncpa [#allocation5], 0
    // Predicated region
    $region2: #{qnetwork_forward.1} parent=1 // pred_check
      _
    $region3: #{qnetwork_forward.1} parent=1 // pred_check_branch
      %10 = sbr.rel (0) target = $region5
    $region4: #{qnetwork_forward.1} parent=1 // pred_region
      %s12 = ssub.s32 128, 128
      %13 = vsyncadd [#allocation3], %s12
      %s15 = sshll.u32 [#allocation2], 4
      %s16 = int_to_ptr.vmem [resolvable:$true] %s15
      %18 = dma.hbm_to_vmem [thread:$0]  %s0, 128, %s16, [#allocation3]
    $region5: #{qnetwork_forward.1} parent=1 // pred_fallthru
      _
    // Predicated region
    $region6: #{qnetwork_forward.1} parent=1 // pred_check
      _
    $region7: #{qnetwork_forward.1} parent=1 // pred_check_branch
      %20 = sbr.rel (0) target = $region9
    $region8: #{qnetwork_forward.1} parent=1 // pred_region
      %s22 = ssub.s32 1536, 1536
      %23 = vsyncadd [#allocation5], %s22
      %s24 = sshll.u32 [#allocation4], 4
      %s25 = int_to_ptr.vmem [resolvable:$true] %s24
      %30 = dma.hbm_to_vmem [thread:$0]  %s1, 1536, %s25, [#allocation5], 128, 128, 8
    $region9: #{qnetwork_forward.1} parent=1 // pred_fallthru
      _
    // Predicated region
    $region10: #{qnetwork_forward.1} parent=1 // pred_check
      _
    $region11: #{qnetwork_forward.1} parent=1 // pred_check_branch
      %32 = sbr.rel (0) target = $region13
    $region12: #{qnetwork_forward.1} parent=1 // pred_region
      %33 = dma.done [#allocation3], 128
    $region13: #{qnetwork_forward.1} parent=1 // pred_fallthru
      _
    // Predicated region
    $region14: #{qnetwork_forward.1} parent=1 // pred_check
      _
    $region15: #{qnetwork_forward.1} parent=1 // pred_check_branch
      %35 = sbr.rel (0) target = $region17
    $region16: #{qnetwork_forward.1} parent=1 // pred_region
      %36 = dma.done [#allocation5], 1536
    $region17: #{qnetwork_forward.1} parent=1 // pred_fallthru
      _
    %v37 = vld [vmem:[#allocation2] sm:$0xff]
    %v38 = vld [vmem:[#allocation4] sm:$0xff]
    %v39 = vld [vmem:[#allocation4 + $0x8] sm:$0xff]
    %v40 = vld [vmem:[#allocation4 + $0x10] sm:$0xff]
    %v41 = vld [vmem:[#allocation4 + $0x18] sm:$0xff]
    %v42 = vld [vmem:[#allocation4 + $0x20] sm:$0xff]
    %v43 = vld [vmem:[#allocation4 + $0x28] sm:$0xff]
    %v44 = vld [vmem:[#allocation4 + $0x30] sm:$0xff]
    %v45 = vld [vmem:[#allocation4 + $0x38] sm:$0xff]
    %v46 = vld [vmem:[#allocation4 + $0x40] sm:$0xff]
    %v47 = vld [vmem:[#allocation4 + $0x48] sm:$0xff]
    %v48 = vld [vmem:[#allocation4 + $0x50] sm:$0xff]
    %v49 = vld [vmem:[#allocation4 + $0x58] sm:$0xff]
    %v50 = vlaneseq
    %v51 = vshrl.u32 %v50, 7
    %v52 = vsub.s32 0, %v51
    %v53 = vrot.slane %v49, %v52
    %vm54 = vcmask 64512
    %v56 = vsel %vm54, %v37, 0
    %58 = vmatprep.subr.mxu0 0.0
    %59 = vmatpush1.msra.mxu0 %v38
    %60 = vmatprep.subr.mxu0 0.0
    %61 = vmatpush1.msra.mxu0 0.0
    %62 = vmatprep.subr.mxu0 0.0
    %63 = vmatpush1.msra.mxu0 0.0
    %64 = vmatprep.subr.mxu0 0.0
    %65 = vmatpush1.msra.mxu0 0.0
    %66 = vmatprep.subr.mxu0 0.0
    %67 = vmatpush1.msra.mxu0 0.0
    %68 = vmatprep.subr.mxu0 0.0
    %69 = vmatpush1.msra.mxu0 0.0
    %70 = vmatprep.subr.mxu0 0.0
    %71 = vmatpush1.msra.mxu0 0.0
    %72 = vmatprep.subr.mxu0 0.0
    %73 = vmatpush1.msra.mxu0 0.0
    %74 = vmatprep.subr.mxu0 0.0
    %75 = vmatpush1.msra.mxu0 0.0
    %76 = vmatprep.subr.mxu0 0.0
    %77 = vmatpush1.msra.mxu0 0.0
    %78 = vmatprep.subr.mxu0 0.0
    %79 = vmatpush1.msra.mxu0 0.0
    %80 = vmatprep.subr.mxu0 0.0
    %81 = vmatpush1.msra.mxu0 0.0
    %82 = vmatprep.subr.mxu0 0.0
    %83 = vmatpush1.msra.mxu0 0.0
    %84 = vmatprep.subr.mxu0 0.0
    %85 = vmatpush1.msra.mxu0 0.0
    %86 = vmatprep.subr.mxu0 0.0
    %87 = vmatpush1.msra.mxu0 0.0
    %88 = vmatprep.subr.mxu0 0.0
    %89 = vmatpush1.msra.mxu0 0.0
    %90 = vmatprep.subr.mxu0 0.0
    %91 = vmatpush1.msra.mxu0 0.0
    %92 = vmatprep.subr.mxu0 0.0
    %93 = vmatpush1.msra.mxu0 0.0
    %94 = vmatprep.subr.mxu0 0.0
    %95 = vmatpush1.msra.mxu0 0.0
    %96 = vmatprep.subr.mxu0 0.0
    %97 = vmatpush1.msra.mxu0 0.0
    %98 = vmatprep.subr.mxu0 0.0
    %99 = vmatpush1.msra.mxu0 0.0
    %100 = vmatprep.subr.mxu0 0.0
    %101 = vmatpush1.msra.mxu0 0.0
    %102 = vmatprep.subr.mxu0 0.0
    %103 = vmatpush1.msra.mxu0 0.0
    %104 = vmatprep.subr.mxu0 0.0
    %105 = vmatpush1.msra.mxu0 0.0
    %106 = vmatprep.subr.mxu0 0.0
    %107 = vmatpush1.msra.mxu0 0.0
    %108 = vmatprep.subr.mxu0 0.0
    %109 = vmatpush1.msra.mxu0 0.0
    %110 = vmatprep.subr.mxu0 0.0
    %111 = vmatpush1.msra.mxu0 0.0
    %112 = vmatprep.subr.mxu0 0.0
    %113 = vmatpush1.msra.mxu0 0.0
    %114 = vmatprep.subr.mxu0 0.0
    %115 = vmatpush1.msra.mxu0 0.0
    %116 = vmatprep.subr.mxu0 0.0
    %117 = vmatpush1.msra.mxu0 0.0
    %118 = vmatprep.subr.mxu0 0.0
    %119 = vmatpush1.msra.mxu0 0.0
    %120 = vmatprep.subr.mxu0 0.0
    %121 = vmatpush1.msra.mxu0 0.0
    %122 = vmatprep.mubr.f32.mxu0 0.0
    %123 = vmatmul.mubr.f32.gmra.mrb[0].mxu0 %v56
    %v124 = vpop.f32.mrb[0].mxu0
    %v125 = vadd.f32 %v53, %v124
    %v126 = vpop.f32.mrb[0].mxu0
    %127 = vdwg.mxu0
    %v128 = vmax.f32 %v125, 0.0
    %v129 = vlaneseq
    %v130 = vshrl.u32 %v129, 7
    %v131 = vsub.s32 1, %v130
    %v132 = vrot.slane %v49, %v131
    %vm133 = vcmask 261120
    %v135 = vsel %vm133, %v128, 0
    %137 = vmatprep.subr.mxu0 0.0
    %138 = vmatpush1.msra.mxu0 %v39
    %139 = vmatprep.subr.mxu0 0.0
    %140 = vmatpush1.msra.mxu0 %v40
    %141 = vmatprep.subr.mxu0 0.0
    %142 = vmatpush1.msra.mxu0 %v41
    %143 = vmatprep.subr.mxu0 0.0
    %144 = vmatpush1.msra.mxu0 %v42
    %145 = vmatprep.subr.mxu0 0.0
    %146 = vmatpush1.msra.mxu0 0.0
    %147 = vmatprep.subr.mxu0 0.0
    %148 = vmatpush1.msra.mxu0 0.0
    %149 = vmatprep.subr.mxu0 0.0
    %150 = vmatpush1.msra.mxu0 0.0
    %151 = vmatprep.subr.mxu0 0.0
    %152 = vmatpush1.msra.mxu0 0.0
    %153 = vmatprep.subr.mxu0 0.0
    %154 = vmatpush1.msra.mxu0 0.0
    %155 = vmatprep.subr.mxu0 0.0
    %156 = vmatpush1.msra.mxu0 0.0
    %157 = vmatprep.subr.mxu0 0.0
    %158 = vmatpush1.msra.mxu0 0.0
    %159 = vmatprep.subr.mxu0 0.0
    %160 = vmatpush1.msra.mxu0 0.0
    %161 = vmatprep.subr.mxu0 0.0
    %162 = vmatpush1.msra.mxu0 0.0
    %163 = vmatprep.subr.mxu0 0.0
    %164 = vmatpush1.msra.mxu0 0.0
    %165 = vmatprep.subr.mxu0 0.0
    %166 = vmatpush1.msra.mxu0 0.0
    %167 = vmatprep.subr.mxu0 0.0
    %168 = vmatpush1.msra.mxu0 0.0
    %169 = vmatprep.subr.mxu0 0.0
    %170 = vmatpush1.msra.mxu0 0.0
    %171 = vmatprep.subr.mxu0 0.0
    %172 = vmatpush1.msra.mxu0 0.0
    %173 = vmatprep.subr.mxu0 0.0
    %174 = vmatpush1.msra.mxu0 0.0
    %175 = vmatprep.subr.mxu0 0.0
    %176 = vmatpush1.msra.mxu0 0.0
    %177 = vmatprep.subr.mxu0 0.0
    %178 = vmatpush1.msra.mxu0 0.0
    %179 = vmatprep.subr.mxu0 0.0
    %180 = vmatpush1.msra.mxu0 0.0
    %181 = vmatprep.subr.mxu0 0.0
    %182 = vmatpush1.msra.mxu0 0.0
    %183 = vmatprep.subr.mxu0 0.0
    %184 = vmatpush1.msra.mxu0 0.0
    %185 = vmatprep.subr.mxu0 0.0
    %186 = vmatpush1.msra.mxu0 0.0
    %187 = vmatprep.subr.mxu0 0.0
    %188 = vmatpush1.msra.mxu0 0.0
    %189 = vmatprep.subr.mxu0 0.0
    %190 = vmatpush1.msra.mxu0 0.0
    %191 = vmatprep.subr.mxu0 0.0
    %192 = vmatpush1.msra.mxu0 0.0
    %193 = vmatprep.subr.mxu0 0.0
    %194 = vmatpush1.msra.mxu0 0.0
    %195 = vmatprep.subr.mxu0 0.0
    %196 = vmatpush1.msra.mxu0 0.0
    %197 = vmatprep.subr.mxu0 0.0
    %198 = vmatpush1.msra.mxu0 0.0
    %199 = vmatprep.subr.mxu0 0.0
    %200 = vmatpush1.msra.mxu0 0.0
    %201 = vmatprep.mubr.f32.mxu0 0.0
    %202 = vmatmul.mubr.f32.gmra.mrb[0].mxu0 %v135
    %v203 = vpop.f32.mrb[0].mxu0
    %v204 = vadd.f32 %v132, %v203
    %v205 = vpop.f32.mrb[0].mxu0
    %206 = vdwg.mxu0
    %v207 = vmax.f32 %v204, 0.0
    %v208 = vlaneseq
    %v209 = vshrl.u32 %v208, 7
    %v210 = vsub.s32 2, %v209
    %v211 = vrot.slane %v49, %v210
    %vm212 = vcmask 130048
    %v214 = vsel %vm212, %v207, 0
    %216 = vmatprep.subr.mxu0 0.0
    %217 = vmatpush1.msra.mxu0 %v43
    %218 = vmatprep.subr.mxu0 0.0
    %219 = vmatpush1.msra.mxu0 %v44
    %220 = vmatprep.subr.mxu0 0.0
    %221 = vmatpush1.msra.mxu0 0.0
    %222 = vmatprep.subr.mxu0 0.0
    %223 = vmatpush1.msra.mxu0 0.0
    %224 = vmatprep.subr.mxu0 0.0
    %225 = vmatpush1.msra.mxu0 0.0
    %226 = vmatprep.subr.mxu0 0.0
    %227 = vmatpush1.msra.mxu0 0.0
    %228 = vmatprep.subr.mxu0 0.0
    %229 = vmatpush1.msra.mxu0 0.0
    %230 = vmatprep.subr.mxu0 0.0
    %231 = vmatpush1.msra.mxu0 0.0
    %232 = vmatprep.subr.mxu0 0.0
    %233 = vmatpush1.msra.mxu0 0.0
    %234 = vmatprep.subr.mxu0 0.0
    %235 = vmatpush1.msra.mxu0 0.0
    %236 = vmatprep.subr.mxu0 0.0
    %237 = vmatpush1.msra.mxu0 0.0
    %238 = vmatprep.subr.mxu0 0.0
    %239 = vmatpush1.msra.mxu0 0.0
    %240 = vmatprep.subr.mxu0 0.0
    %241 = vmatpush1.msra.mxu0 0.0
    %242 = vmatprep.subr.mxu0 0.0
    %243 = vmatpush1.msra.mxu0 0.0
    %244 = vmatprep.subr.mxu0 0.0
    %245 = vmatpush1.msra.mxu0 0.0
    %246 = vmatprep.subr.mxu0 0.0
    %247 = vmatpush1.msra.mxu0 0.0
    %248 = vmatprep.subr.mxu0 0.0
    %249 = vmatpush1.msra.mxu0 0.0
    %250 = vmatprep.subr.mxu0 0.0
    %251 = vmatpush1.msra.mxu0 0.0
    %252 = vmatprep.subr.mxu0 0.0
    %253 = vmatpush1.msra.mxu0 0.0
    %254 = vmatprep.subr.mxu0 0.0
    %255 = vmatpush1.msra.mxu0 0.0
    %256 = vmatprep.subr.mxu0 0.0
    %257 = vmatpush1.msra.mxu0 0.0
    %258 = vmatprep.subr.mxu0 0.0
    %259 = vmatpush1.msra.mxu0 0.0
    %260 = vmatprep.subr.mxu0 0.0
    %261 = vmatpush1.msra.mxu0 0.0
    %262 = vmatprep.subr.mxu0 0.0
    %263 = vmatpush1.msra.mxu0 0.0
    %264 = vmatprep.subr.mxu0 0.0
    %265 = vmatpush1.msra.mxu0 0.0
    %266 = vmatprep.subr.mxu0 0.0
    %267 = vmatpush1.msra.mxu0 0.0
    %268 = vmatprep.subr.mxu0 0.0
    %269 = vmatpush1.msra.mxu0 0.0
    %270 = vmatprep.subr.mxu0 0.0
    %271 = vmatpush1.msra.mxu0 0.0
    %272 = vmatprep.subr.mxu0 0.0
    %273 = vmatpush1.msra.mxu0 0.0
    %274 = vmatprep.subr.mxu0 0.0
    %275 = vmatpush1.msra.mxu0 0.0
    %276 = vmatprep.subr.mxu0 0.0
    %277 = vmatpush1.msra.mxu0 0.0
    %278 = vmatprep.subr.mxu0 0.0
    %279 = vmatpush1.msra.mxu0 0.0
    %280 = vmatprep.mubr.f32.mxu0 0.0
    %281 = vmatmul.mubr.f32.gmra.mrb[0].mxu0 %v214
    %v282 = vpop.f32.mrb[0].mxu0
    %v283 = vadd.f32 %v211, %v282
    %v284 = vpop.f32.mrb[0].mxu0
    %285 = vdwg.mxu0
    %v286 = vmax.f32 %v283, 0.0
    %v287 = vlaneseq
    %v288 = vshrl.u32 %v287, 7
    %v289 = vsub.s32 3, %v288
    %v290 = vrot.slane %v49, %v289
    %v292 = vsel %vm133, %v286, 0
    %294 = vmatprep.subr.mxu0 0.0
    %295 = vmatpush1.msra.mxu0 %v45
    %296 = vmatprep.subr.mxu0 0.0
    %297 = vmatpush1.msra.mxu0 %v46
    %298 = vmatprep.subr.mxu0 0.0
    %299 = vmatpush1.msra.mxu0 %v47
    %300 = vmatprep.subr.mxu0 0.0
    %301 = vmatpush1.msra.mxu0 %v48
    %302 = vmatprep.subr.mxu0 0.0
    %303 = vmatpush1.msra.mxu0 0.0
    %304 = vmatprep.subr.mxu0 0.0
    %305 = vmatpush1.msra.mxu0 0.0
    %306 = vmatprep.subr.mxu0 0.0
    %307 = vmatpush1.msra.mxu0 0.0
    %308 = vmatprep.subr.mxu0 0.0
    %309 = vmatpush1.msra.mxu0 0.0
    %310 = vmatprep.subr.mxu0 0.0
    %311 = vmatpush1.msra.mxu0 0.0
    %312 = vmatprep.subr.mxu0 0.0
    %313 = vmatpush1.msra.mxu0 0.0
    %314 = vmatprep.subr.mxu0 0.0
    %315 = vmatpush1.msra.mxu0 0.0
    %316 = vmatprep.subr.mxu0 0.0
    %317 = vmatpush1.msra.mxu0 0.0
    %318 = vmatprep.subr.mxu0 0.0
    %319 = vmatpush1.msra.mxu0 0.0
    %320 = vmatprep.subr.mxu0 0.0
    %321 = vmatpush1.msra.mxu0 0.0
    %322 = vmatprep.subr.mxu0 0.0
    %323 = vmatpush1.msra.mxu0 0.0
    %324 = vmatprep.subr.mxu0 0.0
    %325 = vmatpush1.msra.mxu0 0.0
    %326 = vmatprep.subr.mxu0 0.0
    %327 = vmatpush1.msra.mxu0 0.0
    %328 = vmatprep.subr.mxu0 0.0
    %329 = vmatpush1.msra.mxu0 0.0
    %330 = vmatprep.subr.mxu0 0.0
    %331 = vmatpush1.msra.mxu0 0.0
    %332 = vmatprep.subr.mxu0 0.0
    %333 = vmatpush1.msra.mxu0 0.0
    %334 = vmatprep.subr.mxu0 0.0
    %335 = vmatpush1.msra.mxu0 0.0
    %336 = vmatprep.subr.mxu0 0.0
    %337 = vmatpush1.msra.mxu0 0.0
    %338 = vmatprep.subr.mxu0 0.0
    %339 = vmatpush1.msra.mxu0 0.0
    %340 = vmatprep.subr.mxu0 0.0
    %341 = vmatpush1.msra.mxu0 0.0
    %342 = vmatprep.subr.mxu0 0.0
    %343 = vmatpush1.msra.mxu0 0.0
    %344 = vmatprep.subr.mxu0 0.0
    %345 = vmatpush1.msra.mxu0 0.0
    %346 = vmatprep.subr.mxu0 0.0
    %347 = vmatpush1.msra.mxu0 0.0
    %348 = vmatprep.subr.mxu0 0.0
    %349 = vmatpush1.msra.mxu0 0.0
    %350 = vmatprep.subr.mxu0 0.0
    %351 = vmatpush1.msra.mxu0 0.0
    %352 = vmatprep.subr.mxu0 0.0
    %353 = vmatpush1.msra.mxu0 0.0
    %354 = vmatprep.subr.mxu0 0.0
    %355 = vmatpush1.msra.mxu0 0.0
    %356 = vmatprep.subr.mxu0 0.0
    %357 = vmatpush1.msra.mxu0 0.0
    %358 = vmatprep.mubr.f32.mxu0 0.0
    %359 = vmatmul.mubr.f32.gmra.mrb[0].mxu0 %v292
    %v360 = vpop.f32.mrb[0].mxu0
    %v361 = vadd.f32 %v290, %v360
    %v362 = vpop.f32.mrb[0].mxu0
    %363 = vdwg.mxu0
    %v364 = vmax.f32 %v361, 0.0
    %vm365 = vcmask 31744
    %v366 = vsel %vm365, %v364, 0.0
    %367 = vadd.xlane.f32.xlu0 %v366
    %v368 = vpop.xlane.xlu0 %367
    %v369 = vrot.slane %v368, 4
    %v370 = vadd.f32 %v368, %v369
    %v371 = vrot.slane %v370, 2
    %v372 = vadd.f32 %v370, %v371
    %v373 = vrot.slane %v372, 1
    %v374 = vadd.f32 %v372, %v373
    %s375 = vtos %v374
    %v376 = vrcp.pop 32.0
    %s377 = vtos %v376
    %s378 = smul.f32 %s375, %s377
    %v379 = vstv %s378
    %v380 = vsub.f32 %v364, %v379
    %382 = vset.pattern.permute.xlu0 4
    %383 = vperm.xlu0 %382, %v364
    %v384 = vpop.permute.xlu0 %383
    %v386 = vadd.f32 %v384, %v380
    %387 = vst [vmem:[%s2] sm:$0xff] %v386
    // Predicated region
    $region18: #{qnetwork_forward.1} parent=1 // pred_check
      _
    $region19: #{qnetwork_forward.1} parent=1 // pred_check_branch
      %389 = sbr.rel (0) target = $region21
    $region20: #{qnetwork_forward.1} parent=1 // pred_region
      _
    $region21: #{qnetwork_forward.1} parent=1 // pred_fallthru
      _
    // Predicated region
    $region22: #{qnetwork_forward.1} parent=1 // pred_check
      _
    $region23: #{qnetwork_forward.1} parent=1 // pred_check_branch
      %391 = sbr.rel (0) target = $region25
    $region24: #{qnetwork_forward.1} parent=1 // pred_region
      _
    $region25: #{qnetwork_forward.1} parent=1 // pred_fallthru
      _
    %392 = vsyncpa [#allocation3], 1
    %393 = vsyncpa [#allocation5], 1

</llo_original>
